<compile_context>
chip_gen: v7x
topology: tpu7x:2x2x1
jax: 0.10.0
libtpu: 0.0.40
codegen_flags: <defaults>
</compile_context>

<pallas_src>
import math
import functools

import jax
import jax.numpy as jnp
from jax.experimental import pallas as pl
from jax.experimental.pallas import tpu as pltpu


def _round_up(x, m):
    return (x + m - 1) // m * m


def _pad_last(x, target):
    pad = target - x.shape[-1]
    if pad == 0:
        return x
    cfg = [(0, 0)] * (x.ndim - 1) + [(0, pad)]
    return jnp.pad(x, cfg)


def _pad_2d(x, rows, cols):
    return jnp.pad(x, ((0, rows - x.shape[0]), (0, cols - x.shape[1])))


def ts_tblock_kernel(write_ref, read_ref,
                     lnr_w_ref, lnr_b_ref,       # read_norm params  (applied to q = write)
                     lnw_w_ref, lnw_b_ref,       # write_norm params (applied to k = v = read)
                     lns_w_ref, lns_b_ref,       # suffix LayerNorm params
                     w1_ref, b1_ref,             # Linear(D -> 2D), weight in bf16
                     w2_ref, b2_ref,             # Linear(2D -> D), weight in bf16
                     out_ref, *, d_true):
    w = write_ref[...].astype(jnp.float32)       # (Bb, Sw, Dp)
    r = read_ref[...].astype(jnp.float32)        # (Bb, Sr, Dp)

    inv_d = 1.0 / d_true

    def layernorm(x, gamma, beta, eps=1e-5):
        # Single pass: sum and sum-of-squares together. Pad lanes of x are exactly
        # zero, so sums over Dp equal sums over the true D; divide by the true D.
        s1 = jnp.sum(x, axis=-1, keepdims=True)
        s2 = jnp.sum(x * x, axis=-1, keepdims=True)
        mu = s1 * inv_d
        var = s2 * inv_d - mu * mu
        # Padded gamma/beta are zero -> pad lanes remain exactly zero after the affine.
        return (x - mu) * jax.lax.rsqrt(var + eps) * gamma + beta

    # --- the pre-attention LayerNorms (note TS_TBlock's norm assignment) ---
    q = layernorm(w, lnr_w_ref[...], lnr_b_ref[...])
    kv = layernorm(r, lnw_w_ref[...], lnw_b_ref[...])   # k == v: compute once, alias

    # --- single-head scaled dot-product attention (bf16 MXU operands, f32 accumulate).
    #     Fold the 1/sqrt(D) scale into q in f32 before the cast (one small multiply
    #     instead of rescaling the (Sw, Sr) score matrix). ---
    scale = 1.0 / math.sqrt(d_true)
    q16 = (q * scale).astype(jnp.bfloat16)
    k16 = kv.astype(jnp.bfloat16)
    s = jnp.einsum("bqd,bkd->bqk", q16, k16,
                   preferred_element_type=jnp.float32)              # (Bb, Sw, Sr)
    s = s - jnp.max(s, axis=-1, keepdims=True)
    p = jnp.exp(s)
    p = p * pl.reciprocal(jnp.sum(p, axis=-1, keepdims=True), approx=True)
    y = jnp.einsum("bqk,bkd->bqd", p.astype(jnp.bfloat16), k16,
                   preferred_element_type=jnp.float32)              # (Bb, Sw, Dp)

    # TODO(synk): attn_dropout / MLP dropouts are identity in eval mode (no RNG in kernel).
    y = y + w                                                        # residual (h = write)

    # --- suffix: Residual( LN -> Linear(D,2D) -> ReLU -> Linear(2D,D) ) ---
    bb, sw, dp = y.shape
    z = layernorm(y, lns_w_ref[...], lns_b_ref[...])
    z2 = z.reshape(bb * sw, dp).astype(jnp.bfloat16)                 # M = Bb*Sw rows -> MXU fill
    h1 = jnp.dot(z2, w1_ref[...], preferred_element_type=jnp.float32) + b1_ref[...]
    h1 = jnp.maximum(h1, 0.0)
    h2 = jnp.dot(h1.astype(jnp.bfloat16), w2_ref[...],
                 preferred_element_type=jnp.float32) + b2_ref[...]

    out_ref[...] = (y + h2.reshape(bb, sw, dp)).astype(out_ref.dtype)


def ts_tblock(read, write, params, *, batch_block=None):
    """Fused TS_TBlock forward. On v7x, pass batch_block=B//2 so both TensorCores
    get a (parallel) grid step; by default the whole batch runs in one step."""
    B, Sw, D = write.shape
    Br, Sr, Dr = read.shape
    assert Br == B and Dr == D, "kv_in_dim defaults to dim in TS_TBlock"
    H = params["w1"].shape[-1]

    Dp = _round_up(D, 128)      # lane-dense feature width
    Hp = _round_up(H, 128)      # lane-dense hidden width

    bblk = B if batch_block is None else batch_block
    assert B % bblk == 0, "batch_block must divide B"
    nb = B // bblk

    # Zero-pad lane dims to multiples of 128 (exact: see kernel layernorm comment).
    write_p = _pad_last(write, Dp)
    read_p = _pad_last(read, Dp)
    lnr_w = _pad_last(params["lnr_w"], Dp)
    lnr_b = _pad_last(params["lnr_b"], Dp)
    lnw_w = _pad_last(params["lnw_w"], Dp)
    lnw_b = _pad_last(params["lnw_b"], Dp)
    lns_w = _pad_last(params["lns_w"], Dp)
    lns_b = _pad_last(params["lns_b"], Dp)
    w1 = _pad_2d(params["w1"], Dp, Hp).astype(jnp.bfloat16)   # bf16 in HBM: half the DMA
    b1 = _pad_last(params["b1"], Hp)
    w2 = _pad_2d(params["w2"], Hp, Dp).astype(jnp.bfloat16)
    b2 = _pad_last(params["b2"], Dp)

    seq_w_spec = pl.BlockSpec((bblk, Sw, Dp), lambda i: (i, 0, 0))
    seq_r_spec = pl.BlockSpec((bblk, Sr, Dp), lambda i: (i, 0, 0))
    vecD_spec = pl.BlockSpec((1, Dp), lambda i: (0, 0))
    vecH_spec = pl.BlockSpec((1, Hp), lambda i: (0, 0))
    w1_spec = pl.BlockSpec((Dp, Hp), lambda i: (0, 0))
    w2_spec = pl.BlockSpec((Hp, Dp), lambda i: (0, 0))

    # Explicit VMEM budget: double-buffered seq blocks + weights + f32 temporaries,
    # 4x headroom, clamped to [8 MiB, 64 MiB] so it is valid on v5e/v6e/v7x.
    f32b = 4
    blk_bytes = (2 * bblk * Sw * Dp + 2 * bblk * Sr * Dp + 2 * bblk * Sw * Dp) * f32b
    wgt_bytes = (Dp * Hp + Hp * Dp) * 2 + (6 * Dp + Hp + Dp) * f32b
    tmp_bytes = (bblk * Sw * Sr + bblk * Sw * Hp + 4 * bblk * Sw * Dp) * f32b
    vmem_limit = int(min(max(4 * (blk_bytes + wgt_bytes + tmp_bytes), 8 << 20), 64 << 20))

    out = pl.pallas_call(
        functools.partial(ts_tblock_kernel, d_true=D),
        out_shape=jax.ShapeDtypeStruct((B, Sw, Dp), write.dtype),
        grid_spec=pltpu.PrefetchScalarGridSpec(
            num_scalar_prefetch=0,
            grid=(nb,),
            in_specs=[
                seq_w_spec, seq_r_spec,
                vecD_spec, vecD_spec,   # read_norm gamma/beta
                vecD_spec, vecD_spec,   # write_norm gamma/beta
                vecD_spec, vecD_spec,   # suffix LN gamma/beta
                w1_spec, vecH_spec,     # Linear1
                w2_spec, vecD_spec,     # Linear2
            ],
            out_specs=seq_w_spec,
        ),
        compiler_params=pltpu.CompilerParams(
            dimension_semantics=("parallel",),
            vmem_limit_bytes=vmem_limit),
    )(write_p, read_p,
      lnr_w, lnr_b, lnw_w, lnw_b, lns_w, lns_b,
      w1, b1, w2, b2)

    return out[..., :D] if Dp != D else out


def ts_tblock_ref(read, write, params):
    """Pure-JAX f32 reference of the same forward pass (the PyTorch spec)."""
    def ln(x, g, b, eps=1e-5):
        mu = jnp.mean(x, axis=-1, keepdims=True)
        var = jnp.mean((x - mu) ** 2, axis=-1, keepdims=True)
        return (x - mu) / jnp.sqrt(var + eps) * g + b

    D = write.shape[-1]
    q = ln(write, params["lnr_w"], params["lnr_b"])
    k = ln(read, params["lnw_w"], params["lnw_b"])
    v = ln(read, params["lnw_w"], params["lnw_b"])
    s = jnp.einsum("bqd,bkd->bqk", q, k) / math.sqrt(D)
    p = jax.nn.softmax(s, axis=-1)
    y = jnp.einsum("bqk,bkd->bqd", p, v) + write
    z = ln(y, params["lns_w"], params["lns_b"])
    h1 = jax.nn.relu(jnp.einsum("bqd,dh->bqh", z, params["w1"]) + params["b1"])
    h2 = jnp.einsum("bqh,hd->bqd", h1, params["w2"]) + params["b2"]
    return y + h2


def make_params(key, dim):
    H = 2 * dim
    k1, k2, k3, k4 = jax.random.split(key, 4)
    bound1 = 1.0 / math.sqrt(dim)
    bound2 = 1.0 / math.sqrt(H)
    return {
        # LayerNorms: PyTorch default init (gamma=1, beta=0), stored as (1, D)
        "lnr_w": jnp.ones((1, dim), jnp.float32),
        "lnr_b": jnp.zeros((1, dim), jnp.float32),
        "lnw_w": jnp.ones((1, dim), jnp.float32),
        "lnw_b": jnp.zeros((1, dim), jnp.float32),
        "lns_w": jnp.ones((1, dim), jnp.float32),
        "lns_b": jnp.zeros((1, dim), jnp.float32),
        # Linear(dim, 2*dim) and Linear(2*dim, dim), uniform(-1/sqrt(fan_in), +)
        "w1": jax.random.uniform(k1, (dim, H), jnp.float32, -bound1, bound1),
        "b1": jax.random.uniform(k2, (1, H), jnp.float32, -bound1, bound1),
        "w2": jax.random.uniform(k3, (H, dim), jnp.float32, -bound2, bound2),
        "b2": jax.random.uniform(k4, (1, dim), jnp.float32, -bound2, bound2),
    }


if __name__ == "__main__":
    B, S_READ, S_WRITE, DIM = 2, 8, 8, 32   # config.dim = 32, kv_in_dim -> dim

    key = jax.random.PRNGKey(0)
    k_read, k_write, k_params = jax.random.split(key, 3)
    read = jax.random.normal(k_read, (B, S_READ, DIM), jnp.float32)
    write = jax.random.normal(k_write, (B, S_WRITE, DIM), jnp.float32)
    params = make_params(k_params, DIM)

    out = ts_tblock(read, write, params)
    out = jax.block_until_ready(out)

    ref = ts_tblock_ref(read, write, params)
    assert out.shape == (B, S_WRITE, DIM)
    # Tolerance accounts for bf16 MXU operands + approx softmax reciprocal in the kernel
    # (the reference is full f32); structural semantics are exact.
    assert jnp.allclose(out, ref, atol=5e-2, rtol=5e-2), "mismatch vs JAX reference"

    print("KERNEL_OK")
</pallas_src>

<mosaic_0001>
module attributes {stable_mosaic.version = 11 : i64} {
  func.func @ts_tblock_kernel(%arg0: i32, %arg1: memref<2x8x128xf32, #tpu.memory_space<vmem>>, %arg2: memref<2x8x128xf32, #tpu.memory_space<vmem>>, %arg3: memref<1x128xf32, #tpu.memory_space<vmem>>, %arg4: memref<1x128xf32, #tpu.memory_space<vmem>>, %arg5: memref<1x128xf32, #tpu.memory_space<vmem>>, %arg6: memref<1x128xf32, #tpu.memory_space<vmem>>, %arg7: memref<1x128xf32, #tpu.memory_space<vmem>>, %arg8: memref<1x128xf32, #tpu.memory_space<vmem>>, %arg9: memref<128x128xbf16, #tpu.memory_space<vmem>>, %arg10: memref<1x128xf32, #tpu.memory_space<vmem>>, %arg11: memref<128x128xbf16, #tpu.memory_space<vmem>>, %arg12: memref<1x128xf32, #tpu.memory_space<vmem>>, %arg13: memref<2x8x128xf32, #tpu.memory_space<vmem>>) attributes {dimension_semantics = [#tpu.dimension_semantics<parallel>], iteration_bounds = array<i64: 1>, scalar_prefetch = 0 : i64, scratch_operands = 0 : i64, tpu.core_type = #tpu.core_type<tc>, window_params = [{transform_indices = @transform_0, window_bounds = array<i64: 2, 8, 128>}, {transform_indices = @transform_1, window_bounds = array<i64: 2, 8, 128>}, {pipeline_mode = #tpu.pipeline_mode<synchronous>, transform_indices = @transform_2, window_bounds = array<i64: 1, 128>}, {pipeline_mode = #tpu.pipeline_mode<synchronous>, transform_indices = @transform_3, window_bounds = array<i64: 1, 128>}, {pipeline_mode = #tpu.pipeline_mode<synchronous>, transform_indices = @transform_4, window_bounds = array<i64: 1, 128>}, {pipeline_mode = #tpu.pipeline_mode<synchronous>, transform_indices = @transform_5, window_bounds = array<i64: 1, 128>}, {pipeline_mode = #tpu.pipeline_mode<synchronous>, transform_indices = @transform_6, window_bounds = array<i64: 1, 128>}, {pipeline_mode = #tpu.pipeline_mode<synchronous>, transform_indices = @transform_7, window_bounds = array<i64: 1, 128>}, {pipeline_mode = #tpu.pipeline_mode<synchronous>, transform_indices = @transform_8, window_bounds = array<i64: 128, 128>}, {pipeline_mode = #tpu.pipeline_mode<synchronous>, transform_indices = @transform_9, window_bounds = array<i64: 1, 128>}, {pipeline_mode = #tpu.pipeline_mode<synchronous>, transform_indices = @transform_10, window_bounds = array<i64: 128, 128>}, {pipeline_mode = #tpu.pipeline_mode<synchronous>, transform_indices = @transform_11, window_bounds = array<i64: 1, 128>}, {transform_indices = @transform_12, window_bounds = array<i64: 2, 8, 128>}]} {
    %c0 = arith.constant 0 : index
    %c0_0 = arith.constant 0 : index
    %c0_1 = arith.constant 0 : index
    %0 = vector.load %arg1[%c0, %c0_0, %c0_1] : memref<2x8x128xf32, #tpu.memory_space<vmem>>, vector<2x8x128xf32>
    %c0_2 = arith.constant 0 : index
    %c0_3 = arith.constant 0 : index
    %c0_4 = arith.constant 0 : index
    %1 = vector.load %arg2[%c0_2, %c0_3, %c0_4] : memref<2x8x128xf32, #tpu.memory_space<vmem>>, vector<2x8x128xf32>
    %c0_5 = arith.constant 0 : index
    %c0_6 = arith.constant 0 : index
    %2 = vector.load %arg3[%c0_5, %c0_6] : memref<1x128xf32, #tpu.memory_space<vmem>>, vector<1x128xf32>
    %c0_7 = arith.constant 0 : index
    %c0_8 = arith.constant 0 : index
    %3 = vector.load %arg4[%c0_7, %c0_8] : memref<1x128xf32, #tpu.memory_space<vmem>>, vector<1x128xf32>
    %cst = arith.constant dense<0.000000e+00> : vector<2x8xf32>
    %4 = vector.multi_reduction <add>, %0, %cst [2] : vector<2x8x128xf32> to vector<2x8xf32>
    %5 = vector.shape_cast %4 : vector<2x8xf32> to vector<2x8x1xf32>
    %6 = arith.mulf %0, %0 : vector<2x8x128xf32>
    %cst_9 = arith.constant dense<0.000000e+00> : vector<2x8xf32>
    %7 = vector.multi_reduction <add>, %6, %cst_9 [2] : vector<2x8x128xf32> to vector<2x8xf32>
    %8 = vector.shape_cast %7 : vector<2x8xf32> to vector<2x8x1xf32>
    %cst_10 = arith.constant 3.125000e-02 : f32
    %9 = vector.broadcast %cst_10 : f32 to vector<2x8x1xf32>
    %10 = arith.mulf %5, %9 : vector<2x8x1xf32>
    %cst_11 = arith.constant 3.125000e-02 : f32
    %11 = vector.broadcast %cst_11 : f32 to vector<2x8x1xf32>
    %12 = arith.mulf %8, %11 : vector<2x8x1xf32>
    %13 = arith.mulf %10, %10 : vector<2x8x1xf32>
    %14 = arith.subf %12, %13 : vector<2x8x1xf32>
    %15 = vector.broadcast %10 : vector<2x8x1xf32> to vector<2x8x128xf32>
    %16 = arith.subf %0, %15 : vector<2x8x128xf32>
    %cst_12 = arith.constant 9.99999974E-6 : f32
    %17 = vector.broadcast %cst_12 : f32 to vector<2x8x1xf32>
    %18 = arith.addf %14, %17 : vector<2x8x1xf32>
    %19 = math.rsqrt %18 : vector<2x8x1xf32>
    %20 = vector.broadcast %19 : vector<2x8x1xf32> to vector<2x8x128xf32>
    %21 = arith.mulf %16, %20 : vector<2x8x128xf32>
    %22 = vector.shape_cast %2 : vector<1x128xf32> to vector<1x1x128xf32>
    %23 = vector.broadcast %22 : vector<1x1x128xf32> to vector<2x8x128xf32>
    %24 = arith.mulf %21, %23 : vector<2x8x128xf32>
    %25 = vector.shape_cast %3 : vector<1x128xf32> to vector<1x1x128xf32>
    %26 = vector.broadcast %25 : vector<1x1x128xf32> to vector<2x8x128xf32>
    %27 = arith.addf %24, %26 : vector<2x8x128xf32>
    %c0_13 = arith.constant 0 : index
    %c0_14 = arith.constant 0 : index
    %28 = vector.load %arg5[%c0_13, %c0_14] : memref<1x128xf32, #tpu.memory_space<vmem>>, vector<1x128xf32>
    %c0_15 = arith.constant 0 : index
    %c0_16 = arith.constant 0 : index
    %29 = vector.load %arg6[%c0_15, %c0_16] : memref<1x128xf32, #tpu.memory_space<vmem>>, vector<1x128xf32>
    %cst_17 = arith.constant dense<0.000000e+00> : vector<2x8xf32>
    %30 = vector.multi_reduction <add>, %1, %cst_17 [2] : vector<2x8x128xf32> to vector<2x8xf32>
    %31 = vector.shape_cast %30 : vector<2x8xf32> to vector<2x8x1xf32>
    %32 = arith.mulf %1, %1 : vector<2x8x128xf32>
    %cst_18 = arith.constant dense<0.000000e+00> : vector<2x8xf32>
    %33 = vector.multi_reduction <add>, %32, %cst_18 [2] : vector<2x8x128xf32> to vector<2x8xf32>
    %34 = vector.shape_cast %33 : vector<2x8xf32> to vector<2x8x1xf32>
    %cst_19 = arith.constant 3.125000e-02 : f32
    %35 = vector.broadcast %cst_19 : f32 to vector<2x8x1xf32>
    %36 = arith.mulf %31, %35 : vector<2x8x1xf32>
    %cst_20 = arith.constant 3.125000e-02 : f32
    %37 = vector.broadcast %cst_20 : f32 to vector<2x8x1xf32>
    %38 = arith.mulf %34, %37 : vector<2x8x1xf32>
    %39 = arith.mulf %36, %36 : vector<2x8x1xf32>
    %40 = arith.subf %38, %39 : vector<2x8x1xf32>
    %41 = vector.broadcast %36 : vector<2x8x1xf32> to vector<2x8x128xf32>
    %42 = arith.subf %1, %41 : vector<2x8x128xf32>
    %cst_21 = arith.constant 9.99999974E-6 : f32
    %43 = vector.broadcast %cst_21 : f32 to vector<2x8x1xf32>
    %44 = arith.addf %40, %43 : vector<2x8x1xf32>
    %45 = math.rsqrt %44 : vector<2x8x1xf32>
    %46 = vector.broadcast %45 : vector<2x8x1xf32> to vector<2x8x128xf32>
    %47 = arith.mulf %42, %46 : vector<2x8x128xf32>
    %48 = vector.shape_cast %28 : vector<1x128xf32> to vector<1x1x128xf32>
    %49 = vector.broadcast %48 : vector<1x1x128xf32> to vector<2x8x128xf32>
    %50 = arith.mulf %47, %49 : vector<2x8x128xf32>
    %51 = vector.shape_cast %29 : vector<1x128xf32> to vector<1x1x128xf32>
    %52 = vector.broadcast %51 : vector<1x1x128xf32> to vector<2x8x128xf32>
    %53 = arith.addf %50, %52 : vector<2x8x128xf32>
    %cst_22 = arith.constant 0.176776692 : f32
    %54 = vector.broadcast %cst_22 : f32 to vector<2x8x128xf32>
    %55 = arith.mulf %27, %54 : vector<2x8x128xf32>
    %56 = arith.truncf %55 : vector<2x8x128xf32> to vector<2x8x128xbf16>
    %57 = arith.truncf %53 : vector<2x8x128xf32> to vector<2x8x128xbf16>
    "tpu.trace_start"() <{level = 10 : i32, message = "bqd,bkd->bqk"}> : () -> ()
    %cst_23 = arith.constant dense<0.000000e+00> : vector<2x8x8xf32>
    %58 = tpu.matmul %56, %57, %cst_23 {dimension_numbers = #tpu.dot_dimension_numbers<[2], [2], [1], [1], [0, 0, 0, 1, 1, 1], [0], [0]>} : vector<2x8x128xbf16>, vector<2x8x128xbf16>, vector<2x8x8xf32> -> vector<2x8x8xf32>
    "tpu.trace_stop"() : () -> ()
    %cst_24 = arith.constant dense<0xFF800000> : vector<2x8xf32>
    %59 = vector.multi_reduction <maximumf>, %58, %cst_24 [2] : vector<2x8x8xf32> to vector<2x8xf32>
    %60 = vector.shape_cast %59 : vector<2x8xf32> to vector<2x8x1xf32>
    %61 = vector.broadcast %60 : vector<2x8x1xf32> to vector<2x8x8xf32>
    %62 = arith.subf %58, %61 : vector<2x8x8xf32>
    %63 = math.exp %62 : vector<2x8x8xf32>
    %cst_25 = arith.constant dense<0.000000e+00> : vector<2x8xf32>
    %64 = vector.multi_reduction <add>, %63, %cst_25 [2] : vector<2x8x8xf32> to vector<2x8xf32>
    %65 = vector.shape_cast %64 : vector<2x8xf32> to vector<2x8x1xf32>
    %66 = tpu.reciprocal %65 {approx = true} : vector<2x8x1xf32> -> vector<2x8x1xf32>
    %67 = vector.broadcast %66 : vector<2x8x1xf32> to vector<2x8x8xf32>
    %68 = arith.mulf %63, %67 : vector<2x8x8xf32>
    %69 = arith.truncf %68 : vector<2x8x8xf32> to vector<2x8x8xbf16>
    "tpu.trace_start"() <{level = 10 : i32, message = "bqk,bkd->bqd"}> : () -> ()
    %cst_26 = arith.constant dense<0.000000e+00> : vector<2x8x128xf32>
    %70 = tpu.matmul %69, %57, %cst_26 {dimension_numbers = #tpu.dot_dimension_numbers<[2], [1], [1], [2], [0, 0, 0, 1, 1, 2], [0], [0]>} : vector<2x8x8xbf16>, vector<2x8x128xbf16>, vector<2x8x128xf32> -> vector<2x8x128xf32>
    "tpu.trace_stop"() : () -> ()
    %71 = arith.addf %70, %0 : vector<2x8x128xf32>
    %c0_27 = arith.constant 0 : index
    %c0_28 = arith.constant 0 : index
    %72 = vector.load %arg7[%c0_27, %c0_28] : memref<1x128xf32, #tpu.memory_space<vmem>>, vector<1x128xf32>
    %c0_29 = arith.constant 0 : index
    %c0_30 = arith.constant 0 : index
    %73 = vector.load %arg8[%c0_29, %c0_30] : memref<1x128xf32, #tpu.memory_space<vmem>>, vector<1x128xf32>
    %cst_31 = arith.constant dense<0.000000e+00> : vector<2x8xf32>
    %74 = vector.multi_reduction <add>, %71, %cst_31 [2] : vector<2x8x128xf32> to vector<2x8xf32>
    %75 = vector.shape_cast %74 : vector<2x8xf32> to vector<2x8x1xf32>
    %76 = arith.mulf %71, %71 : vector<2x8x128xf32>
    %cst_32 = arith.constant dense<0.000000e+00> : vector<2x8xf32>
    %77 = vector.multi_reduction <add>, %76, %cst_32 [2] : vector<2x8x128xf32> to vector<2x8xf32>
    %78 = vector.shape_cast %77 : vector<2x8xf32> to vector<2x8x1xf32>
    %cst_33 = arith.constant 3.125000e-02 : f32
    %79 = vector.broadcast %cst_33 : f32 to vector<2x8x1xf32>
    %80 = arith.mulf %75, %79 : vector<2x8x1xf32>
    %cst_34 = arith.constant 3.125000e-02 : f32
    %81 = vector.broadcast %cst_34 : f32 to vector<2x8x1xf32>
    %82 = arith.mulf %78, %81 : vector<2x8x1xf32>
    %83 = arith.mulf %80, %80 : vector<2x8x1xf32>
    %84 = arith.subf %82, %83 : vector<2x8x1xf32>
    %85 = vector.broadcast %80 : vector<2x8x1xf32> to vector<2x8x128xf32>
    %86 = arith.subf %71, %85 : vector<2x8x128xf32>
    %cst_35 = arith.constant 9.99999974E-6 : f32
    %87 = vector.broadcast %cst_35 : f32 to vector<2x8x1xf32>
    %88 = arith.addf %84, %87 : vector<2x8x1xf32>
    %89 = math.rsqrt %88 : vector<2x8x1xf32>
    %90 = vector.broadcast %89 : vector<2x8x1xf32> to vector<2x8x128xf32>
    %91 = arith.mulf %86, %90 : vector<2x8x128xf32>
    %92 = vector.shape_cast %72 : vector<1x128xf32> to vector<1x1x128xf32>
    %93 = vector.broadcast %92 : vector<1x1x128xf32> to vector<2x8x128xf32>
    %94 = arith.mulf %91, %93 : vector<2x8x128xf32>
    %95 = vector.shape_cast %73 : vector<1x128xf32> to vector<1x1x128xf32>
    %96 = vector.broadcast %95 : vector<1x1x128xf32> to vector<2x8x128xf32>
    %97 = arith.addf %94, %96 : vector<2x8x128xf32>
    %98 = vector.shape_cast %97 : vector<2x8x128xf32> to vector<16x128xf32>
    %99 = arith.truncf %98 : vector<16x128xf32> to vector<16x128xbf16>
    %c0_36 = arith.constant 0 : index
    %c0_37 = arith.constant 0 : index
    %100 = vector.load %arg9[%c0_36, %c0_37] : memref<128x128xbf16, #tpu.memory_space<vmem>>, vector<128x128xbf16>
    %cst_38 = arith.constant dense<0.000000e+00> : vector<16x128xf32>
    %101 = tpu.matmul %99, %100, %cst_38 {dimension_numbers = #tpu.dot_dimension_numbers<[1], [0], [0], [1], [0, 0, 1, 1], [], []>} : vector<16x128xbf16>, vector<128x128xbf16>, vector<16x128xf32> -> vector<16x128xf32>
    %c0_39 = arith.constant 0 : index
    %c0_40 = arith.constant 0 : index
    %102 = vector.load %arg10[%c0_39, %c0_40] : memref<1x128xf32, #tpu.memory_space<vmem>>, vector<1x128xf32>
    %103 = vector.broadcast %102 : vector<1x128xf32> to vector<16x128xf32>
    %104 = arith.addf %101, %103 : vector<16x128xf32>
    %cst_41 = arith.constant 0.000000e+00 : f32
    %105 = vector.broadcast %cst_41 : f32 to vector<16x128xf32>
    %106 = arith.maximumf %104, %105 : vector<16x128xf32>
    %107 = arith.truncf %106 : vector<16x128xf32> to vector<16x128xbf16>
    %c0_42 = arith.constant 0 : index
    %c0_43 = arith.constant 0 : index
    %108 = vector.load %arg11[%c0_42, %c0_43] : memref<128x128xbf16, #tpu.memory_space<vmem>>, vector<128x128xbf16>
    %cst_44 = arith.constant dense<0.000000e+00> : vector<16x128xf32>
    %109 = tpu.matmul %107, %108, %cst_44 {dimension_numbers = #tpu.dot_dimension_numbers<[1], [0], [0], [1], [0, 0, 1, 1], [], []>} : vector<16x128xbf16>, vector<128x128xbf16>, vector<16x128xf32> -> vector<16x128xf32>
    %c0_45 = arith.constant 0 : index
    %c0_46 = arith.constant 0 : index
    %110 = vector.load %arg12[%c0_45, %c0_46] : memref<1x128xf32, #tpu.memory_space<vmem>>, vector<1x128xf32>
    %111 = vector.broadcast %110 : vector<1x128xf32> to vector<16x128xf32>
    %112 = arith.addf %109, %111 : vector<16x128xf32>
    %113 = vector.shape_cast %112 : vector<16x128xf32> to vector<2x8x128xf32>
    %114 = arith.addf %71, %113 : vector<2x8x128xf32>
    %c0_47 = arith.constant 0 : index
    %c0_48 = arith.constant 0 : index
    %c0_49 = arith.constant 0 : index
    %115 = vector.load %arg13[%c0_47, %c0_48, %c0_49] : memref<2x8x128xf32, #tpu.memory_space<vmem>>, vector<2x8x128xf32>
    tpu.vector_store %arg13[%c0_47, %c0_48, %c0_49], %114 {strides = array<i32>} : memref<2x8x128xf32, #tpu.memory_space<vmem>>, vector<2x8x128xf32>,
    return
  }
  func.func @transform_0(%arg0: i32) -> (i32, i32, i32) {
    %c0_i32 = arith.constant 0 : i32
    %c0_i32_0 = arith.constant 0 : i32
    %c0_i32_1 = arith.constant 0 : i32
    return %arg0, %c0_i32, %c0_i32_0 : i32, i32, i32
  }
  func.func @transform_1(%arg0: i32) -> (i32, i32, i32) {
    %c0_i32 = arith.constant 0 : i32
    %c0_i32_0 = arith.constant 0 : i32
    %c0_i32_1 = arith.constant 0 : i32
    return %arg0, %c0_i32, %c0_i32_0 : i32, i32, i32
  }
  func.func @transform_2(%arg0: i32) -> (i32, i32) {
    %c0_i32 = arith.constant 0 : i32
    %c0_i32_0 = arith.constant 0 : i32
    %c0_i32_1 = arith.constant 0 : i32
    return %c0_i32, %c0_i32_0 : i32, i32
  }
  func.func @transform_3(%arg0: i32) -> (i32, i32) {
    %c0_i32 = arith.constant 0 : i32
    %c0_i32_0 = arith.constant 0 : i32
    %c0_i32_1 = arith.constant 0 : i32
    return %c0_i32, %c0_i32_0 : i32, i32
  }
  func.func @transform_4(%arg0: i32) -> (i32, i32) {
    %c0_i32 = arith.constant 0 : i32
    %c0_i32_0 = arith.constant 0 : i32
    %c0_i32_1 = arith.constant 0 : i32
    return %c0_i32, %c0_i32_0 : i32, i32
  }
  func.func @transform_5(%arg0: i32) -> (i32, i32) {
    %c0_i32 = arith.constant 0 : i32
    %c0_i32_0 = arith.constant 0 : i32
    %c0_i32_1 = arith.constant 0 : i32
    return %c0_i32, %c0_i32_0 : i32, i32
  }
  func.func @transform_6(%arg0: i32) -> (i32, i32) {
    %c0_i32 = arith.constant 0 : i32
    %c0_i32_0 = arith.constant 0 : i32
    %c0_i32_1 = arith.constant 0 : i32
    return %c0_i32, %c0_i32_0 : i32, i32
  }
  func.func @transform_7(%arg0: i32) -> (i32, i32) {
    %c0_i32 = arith.constant 0 : i32
    %c0_i32_0 = arith.constant 0 : i32
    %c0_i32_1 = arith.constant 0 : i32
    return %c0_i32, %c0_i32_0 : i32, i32
  }
  func.func @transform_8(%arg0: i32) -> (i32, i32) {
    %c0_i32 = arith.constant 0 : i32
    %c0_i32_0 = arith.constant 0 : i32
    %c0_i32_1 = arith.constant 0 : i32
    return %c0_i32, %c0_i32_0 : i32, i32
  }
  func.func @transform_9(%arg0: i32) -> (i32, i32) {
    %c0_i32 = arith.constant 0 : i32
    %c0_i32_0 = arith.constant 0 : i32
    %c0_i32_1 = arith.constant 0 : i32
    return %c0_i32, %c0_i32_0 : i32, i32
  }
  func.func @transform_10(%arg0: i32) -> (i32, i32) {
    %c0_i32 = arith.constant 0 : i32
    %c0_i32_0 = arith.constant 0 : i32
    %c0_i32_1 = arith.constant 0 : i32
    return %c0_i32, %c0_i32_0 : i32, i32
  }
  func.func @transform_11(%arg0: i32) -> (i32, i32) {
    %c0_i32 = arith.constant 0 : i32
    %c0_i32_0 = arith.constant 0 : i32
    %c0_i32_1 = arith.constant 0 : i32
    return %c0_i32, %c0_i32_0 : i32, i32
  }
  func.func @transform_12(%arg0: i32) -> (i32, i32, i32) {
    %c0_i32 = arith.constant 0 : i32
    %c0_i32_0 = arith.constant 0 : i32
    %c0_i32_1 = arith.constant 0 : i32
    return %arg0, %c0_i32, %c0_i32_0 : i32, i32, i32
  }
}

</mosaic_0001>

<llo_original>
// kernel: tpu_custom_call.1
$region0: #{tpu_custom_call.1}
  #allocation0 [shape = 'u32[]', space=smem, size = 0x4, offset = 0x4, fixed_abs, tag = 'smem constant byte address 0x4 - core index']
  #allocation1 [shape = 'u32[144,128]{1,0:T(1,128)}', space=vmem, size = 0x12000, scoped, tag = 'internal scratch']
  %s0 = inlined_call_operand.hbm [shape: f32[2,8,128], index: 0, kind: input, shape index: {}]
  %s1 = inlined_call_operand.hbm [shape: f32[2,8,128], index: 1, kind: input, shape index: {}]
  %s2 = inlined_call_operand.vmem [shape: f32[1,128], index: 2, kind: input, shape index: {}]
  %s3 = inlined_call_operand.vmem [shape: f32[1,128], index: 3, kind: input, shape index: {}]
  %s4 = inlined_call_operand.vmem [shape: f32[1,128], index: 4, kind: input, shape index: {}]
  %s5 = inlined_call_operand.vmem [shape: f32[1,128], index: 5, kind: input, shape index: {}]
  %s6 = inlined_call_operand.vmem [shape: f32[1,128], index: 6, kind: input, shape index: {}]
  %s7 = inlined_call_operand.vmem [shape: f32[1,128], index: 7, kind: input, shape index: {}]
  %s8 = inlined_call_operand.hbm [shape: bf16[128,128], index: 8, kind: input, shape index: {}]
  %s9 = inlined_call_operand.vmem [shape: f32[1,128], index: 9, kind: input, shape index: {}]
  %s10 = inlined_call_operand.hbm [shape: bf16[128,128], index: 10, kind: input, shape index: {}]
  %s11 = inlined_call_operand.vmem [shape: f32[1,128], index: 11, kind: input, shape index: {}]
  %s12 = inlined_call_operand.hbm [shape: f32[2,8,128], index: 12, kind: output, shape index: {}]
  %s13 = sld [smem:[#allocation0]]
  $region74: #{tpu_custom_call.1} parent=0
    _
  %s15 = ssub.s32 1, %s13
  %s16 = scalar_select 0, %s15, %s13
  $region1: #{tpu_custom_call.1} parent=0
    #allocation2 [shape = 'u8[8192]{0}', space=vmem, size = 0x2000, scoped, tag = 'input window, operand 0, single buffered']
    #allocation3 [shape = 's32[1]{0}', space=sflag, size = 0x4, scoped, tag = 'scoped memory for tpu_custom_call.1']
    #allocation4 [shape = 's32[1]{0}', space=sflag, size = 0x4, scoped, tag = 'scoped memory for tpu_custom_call.1']
    #allocation5 [shape = 'u8[8192]{0}', space=vmem, size = 0x2000, scoped, tag = 'input window, operand 1, single buffered']
    #allocation6 [shape = 's32[1]{0}', space=sflag, size = 0x4, scoped, tag = 'scoped memory for tpu_custom_call.1']
    #allocation7 [shape = 'u8[32768]{0}', space=vmem, size = 0x8000, scoped, tag = 'input window, operand 8, single buffered']
    #allocation8 [shape = 'u8[32768]{0}', space=vmem, size = 0x8000, scoped, tag = 'input window, operand 10, single buffered']
    #allocation9 [shape = 's32[1]{0}', space=sflag, size = 0x4, scoped, tag = 'scoped memory for tpu_custom_call.1']
    #allocation10 [shape = 'u8[8192]{0}', space=vmem, size = 0x2000, scoped, tag = 'output window, operand 0, single buffered']
    %17 = vsyncpa [#allocation3], 0
    %18 = vsyncpa [#allocation6], 0
    %19 = vsyncpa [#allocation9], 0
    %20 = vsyncpa [#allocation4], 0
    // Predicated region
    $region2: #{tpu_custom_call.1} parent=1 // pred_check
      _
    $region3: #{tpu_custom_call.1} parent=1 // pred_check_branch
      %22 = sbr.rel (0) target = $region5
    $region4: #{tpu_custom_call.1} parent=1 // pred_region
      %s24 = ssub.s32 256, 256
      %25 = vsyncadd [#allocation3], %s24
      %s26 = sshll.u32 [#allocation2], 4
      %s27 = int_to_ptr.vmem [resolvable:$true] %s26
      %32 = dma.hbm_to_vmem [thread:$0]  %s0, 256, %s27, [#allocation3], 128, 128, 8
    $region5: #{tpu_custom_call.1} parent=1 // pred_fallthru
      _
    // Predicated region
    $region6: #{tpu_custom_call.1} parent=1 // pred_check
      _
    $region7: #{tpu_custom_call.1} parent=1 // pred_check_branch
      %34 = sbr.rel (0) target = $region9
    $region8: #{tpu_custom_call.1} parent=1 // pred_region
      %s36 = ssub.s32 256, 256
      %37 = vsyncadd [#allocation6], %s36
      %s38 = sshll.u32 [#allocation5], 4
      %s39 = int_to_ptr.vmem [resolvable:$true] %s38
      %44 = dma.hbm_to_vmem [thread:$0]  %s1, 256, %s39, [#allocation6], 128, 128, 8
    $region9: #{tpu_custom_call.1} parent=1 // pred_fallthru
      _
    // Predicated region
    $region10: #{tpu_custom_call.1} parent=1 // pred_check
      _
    $region11: #{tpu_custom_call.1} parent=1 // pred_check_branch
      %46 = sbr.rel (0) target = $region13
    $region12: #{tpu_custom_call.1} parent=1 // pred_region
      _
    $region13: #{tpu_custom_call.1} parent=1 // pred_fallthru
      _
    // Predicated region
    $region14: #{tpu_custom_call.1} parent=1 // pred_check
      _
    $region15: #{tpu_custom_call.1} parent=1 // pred_check_branch
      %48 = sbr.rel (0) target = $region17
    $region16: #{tpu_custom_call.1} parent=1 // pred_region
      _
    $region17: #{tpu_custom_call.1} parent=1 // pred_fallthru
      _
    // Predicated region
    $region18: #{tpu_custom_call.1} parent=1 // pred_check
      _
    $region19: #{tpu_custom_call.1} parent=1 // pred_check_branch
      %50 = sbr.rel (0) target = $region21
    $region20: #{tpu_custom_call.1} parent=1 // pred_region
      _
    $region21: #{tpu_custom_call.1} parent=1 // pred_fallthru
      _
    // Predicated region
    $region22: #{tpu_custom_call.1} parent=1 // pred_check
      _
    $region23: #{tpu_custom_call.1} parent=1 // pred_check_branch
      %52 = sbr.rel (0) target = $region25
    $region24: #{tpu_custom_call.1} parent=1 // pred_region
      _
    $region25: #{tpu_custom_call.1} parent=1 // pred_fallthru
      _
    // Predicated region
    $region26: #{tpu_custom_call.1} parent=1 // pred_check
      _
    $region27: #{tpu_custom_call.1} parent=1 // pred_check_branch
      %54 = sbr.rel (0) target = $region29
    $region28: #{tpu_custom_call.1} parent=1 // pred_region
      _
    $region29: #{tpu_custom_call.1} parent=1 // pred_fallthru
      _
    // Predicated region
    $region30: #{tpu_custom_call.1} parent=1 // pred_check
      _
    $region31: #{tpu_custom_call.1} parent=1 // pred_check_branch
      %56 = sbr.rel (0) target = $region33
    $region32: #{tpu_custom_call.1} parent=1 // pred_region
      _
    $region33: #{tpu_custom_call.1} parent=1 // pred_fallthru
      _
    // Predicated region
    $region34: #{tpu_custom_call.1} parent=1 // pred_check
      _
    $region35: #{tpu_custom_call.1} parent=1 // pred_check_branch
      %58 = sbr.rel (0) target = $region37
    $region36: #{tpu_custom_call.1} parent=1 // pred_region
      %s60 = ssub.s32 1024, 1024
      %61 = vsyncadd [#allocation6], %s60
      %s62 = sshll.u32 [#allocation7], 4
      %s63 = int_to_ptr.vmem [resolvable:$true] %s62
      %68 = dma.hbm_to_vmem [thread:$0]  %s8, 1024, %s63, [#allocation6], 64, 64, 4
    $region37: #{tpu_custom_call.1} parent=1 // pred_fallthru
      _
    // Predicated region
    $region38: #{tpu_custom_call.1} parent=1 // pred_check
      _
    $region39: #{tpu_custom_call.1} parent=1 // pred_check_branch
      %70 = sbr.rel (0) target = $region41
    $region40: #{tpu_custom_call.1} parent=1 // pred_region
      _
    $region41: #{tpu_custom_call.1} parent=1 // pred_fallthru
      _
    // Predicated region
    $region42: #{tpu_custom_call.1} parent=1 // pred_check
      _
    $region43: #{tpu_custom_call.1} parent=1 // pred_check_branch
      %72 = sbr.rel (0) target = $region45
    $region44: #{tpu_custom_call.1} parent=1 // pred_region
      %s74 = ssub.s32 1024, 1024
      %75 = vsyncadd [#allocation9], %s74
      %s76 = sshll.u32 [#allocation8], 4
      %s77 = int_to_ptr.vmem [resolvable:$true] %s76
      %82 = dma.hbm_to_vmem [thread:$0]  %s10, 1024, %s77, [#allocation9], 64, 64, 4
    $region45: #{tpu_custom_call.1} parent=1 // pred_fallthru
      _
    // Predicated region
    $region46: #{tpu_custom_call.1} parent=1 // pred_check
      _
    $region47: #{tpu_custom_call.1} parent=1 // pred_check_branch
      %84 = sbr.rel (0) target = $region49
    $region48: #{tpu_custom_call.1} parent=1 // pred_region
      _
    $region49: #{tpu_custom_call.1} parent=1 // pred_fallthru
      _
    // Predicated region
    $region50: #{tpu_custom_call.1} parent=1 // pred_check
      _
    $region51: #{tpu_custom_call.1} parent=1 // pred_check_branch
      %86 = sbr.rel (0) target = $region53
    $region52: #{tpu_custom_call.1} parent=1 // pred_region
      %87 = dma.done [#allocation3], 256
    $region53: #{tpu_custom_call.1} parent=1 // pred_fallthru
      _
    // Predicated region
    $region54: #{tpu_custom_call.1} parent=1 // pred_check
      _
    $region55: #{tpu_custom_call.1} parent=1 // pred_check_branch
      %89 = sbr.rel (0) target = $region57
    $region56: #{tpu_custom_call.1} parent=1 // pred_region
      %90 = dma.done [#allocation6], 256
    $region57: #{tpu_custom_call.1} parent=1 // pred_fallthru
      _
    // Predicated region
    $region58: #{tpu_custom_call.1} parent=1 // pred_check
      _
    $region59: #{tpu_custom_call.1} parent=1 // pred_check_branch
      %92 = sbr.rel (0) target = $region61
    $region60: #{tpu_custom_call.1} parent=1 // pred_region
      %93 = dma.done [#allocation6], 1024
    $region61: #{tpu_custom_call.1} parent=1 // pred_fallthru
      _
    // Predicated region
    $region62: #{tpu_custom_call.1} parent=1 // pred_check
      _
    $region63: #{tpu_custom_call.1} parent=1 // pred_check_branch
      %95 = sbr.rel (0) target = $region65
    $region64: #{tpu_custom_call.1} parent=1 // pred_region
      %96 = dma.done [#allocation9], 1024
    $region65: #{tpu_custom_call.1} parent=1 // pred_fallthru
      _
    %v98 = vld [vmem:[#allocation2] sm:$0xff]
    %v99 = vld [vmem:[#allocation2 + $0x8] sm:$0xff]
    %v100 = vld [vmem:[#allocation5] sm:$0xff]
    %v101 = vld [vmem:[#allocation5 + $0x8] sm:$0xff]
    %v102 = vld [vmem:[%s2] sm:$0x1]
    %v103 = vld [vmem:[%s3] sm:$0x1]
    %104 = vadd.xlane.f32.xlu0 %v98
    %v105 = vpop.xlane.xlu0 %104
    %106 = vadd.xlane.f32.xlu0 %v99
    %v107 = vpop.xlane.xlu0 %106
    %v108 = vmul.f32 %v98, %v98
    %v109 = vmul.f32 %v99, %v99
    %110 = vadd.xlane.f32.xlu0 %v108
    %v111 = vpop.xlane.xlu0 %110
    %112 = vadd.xlane.f32.xlu0 %v109
    %v113 = vpop.xlane.xlu0 %112
    %v114 = vmul.f32 %v105, 0.03125
    %v115 = vmul.f32 %v107, 0.03125
    %v116 = vmul.f32 %v111, 0.03125
    %v117 = vmul.f32 %v113, 0.03125
    %v118 = vmul.f32 %v114, %v114
    %v119 = vmul.f32 %v115, %v115
    %v120 = vsub.f32 %v116, %v118
    %v121 = vsub.f32 %v117, %v119
    %v122 = vsub.f32 %v98, %v114
    %v123 = vsub.f32 %v99, %v115
    %v124 = vadd.f32 %v120, 1e-05
    %v125 = vadd.f32 %v121, 1e-05
    %v126 = vrsqrt.pop %v124
    %v127 = vrsqrt.pop %v125
    %v128 = vmul.f32 %v122, %v126
    %v129 = vmul.f32 %v123, %v127
    %v131 = vlaneseq
    %v132 = vshrl.u32 %v131, 7
    %v133 = vsub.s32 0, %v132
    %v134 = vrot.slane %v102, %v133
    %v136 = vmul.f32 %v128, %v134
    %v137 = vmul.f32 %v129, %v134
    %v139 = vlaneseq
    %v140 = vshrl.u32 %v139, 7
    %v141 = vsub.s32 0, %v140
    %v142 = vrot.slane %v103, %v141
    %v144 = vadd.f32 %v136, %v142
    %v145 = vadd.f32 %v137, %v142
    %v146 = vld [vmem:[%s4] sm:$0x1]
    %v147 = vld [vmem:[%s5] sm:$0x1]
    %148 = vadd.xlane.f32.xlu0 %v100
    %v149 = vpop.xlane.xlu0 %148
    %150 = vadd.xlane.f32.xlu0 %v101
    %v151 = vpop.xlane.xlu0 %150
    %v152 = vmul.f32 %v100, %v100
    %v153 = vmul.f32 %v101, %v101
    %154 = vadd.xlane.f32.xlu0 %v152
    %v155 = vpop.xlane.xlu0 %154
    %156 = vadd.xlane.f32.xlu0 %v153
    %v157 = vpop.xlane.xlu0 %156
    %v158 = vmul.f32 %v149, 0.03125
    %v159 = vmul.f32 %v151, 0.03125
    %v160 = vmul.f32 %v155, 0.03125
    %v161 = vmul.f32 %v157, 0.03125
    %v162 = vmul.f32 %v158, %v158
    %v163 = vmul.f32 %v159, %v159
    %v164 = vsub.f32 %v160, %v162
    %v165 = vsub.f32 %v161, %v163
    %v166 = vsub.f32 %v100, %v158
    %v167 = vsub.f32 %v101, %v159
    %v168 = vadd.f32 %v164, 1e-05
    %v169 = vadd.f32 %v165, 1e-05
    %v170 = vrsqrt.pop %v168
    %v171 = vrsqrt.pop %v169
    %v172 = vmul.f32 %v166, %v170
    %v173 = vmul.f32 %v167, %v171
    %v175 = vlaneseq
    %v176 = vshrl.u32 %v175, 7
    %v177 = vsub.s32 0, %v176
    %v178 = vrot.slane %v146, %v177
    %v180 = vmul.f32 %v172, %v178
    %v181 = vmul.f32 %v173, %v178
    %v183 = vlaneseq
    %v184 = vshrl.u32 %v183, 7
    %v185 = vsub.s32 0, %v184
    %v186 = vrot.slane %v147, %v185
    %v188 = vadd.f32 %v180, %v186
    %v189 = vadd.f32 %v181, %v186
    %v190 = vmul.f32 %v144, 0.17677669
    %v191 = vmul.f32 %v145, 0.17677669
    %v192 = vpack.c.bf16 %v190, %v190
    %v193 = vpack.c.bf16 %v191, %v191
    %v194 = vpack.c.bf16 %v188, %v188
    %v195 = vpack.c.bf16 %v189, %v189
    %196 = vmatprep.subr.bf16.mxu0 0
    %197 = vmatpush1.bf16.xpose.msra.mxu0 %v194
    %198 = vmatprep.subr.bf16.mxu0 0
    %199 = vmatpush1.bf16.xpose.msra.mxu0 0
    %200 = vmatprep.subr.bf16.mxu0 0
    %201 = vmatpush1.bf16.xpose.msra.mxu0 0
    %202 = vmatprep.subr.bf16.mxu0 0
    %203 = vmatpush1.bf16.xpose.msra.mxu0 0
    %204 = vmatprep.subr.bf16.mxu0 0
    %205 = vmatpush1.bf16.xpose.msra.mxu0 0
    %206 = vmatprep.subr.bf16.mxu0 0
    %207 = vmatpush1.bf16.xpose.msra.mxu0 0
    %208 = vmatprep.subr.bf16.mxu0 0
    %209 = vmatpush1.bf16.xpose.msra.mxu0 0
    %210 = vmatprep.subr.bf16.mxu0 0
    %211 = vmatpush1.bf16.xpose.msra.mxu0 0
    %212 = vmatprep.subr.bf16.mxu0 0
    %213 = vmatpush1.bf16.xpose.msra.mxu0 0
    %214 = vmatprep.subr.bf16.mxu0 0
    %215 = vmatpush1.bf16.xpose.msra.mxu0 0
    %216 = vmatprep.subr.bf16.mxu0 0
    %217 = vmatpush1.bf16.xpose.msra.mxu0 0
    %218 = vmatprep.subr.bf16.mxu0 0
    %219 = vmatpush1.bf16.xpose.msra.mxu0 0
    %220 = vmatprep.subr.bf16.mxu0 0
    %221 = vmatpush1.bf16.xpose.msra.mxu0 0
    %222 = vmatprep.subr.bf16.mxu0 0
    %223 = vmatpush1.bf16.xpose.msra.mxu0 0
    %224 = vmatprep.subr.bf16.mxu0 0
    %225 = vmatpush1.bf16.xpose.msra.mxu0 0
    %226 = vmatprep.subr.bf16.mxu0 0
    %227 = vmatpush1.bf16.xpose.msra.mxu0 0
    %228 = vmatprep.mubr.bf16.mxu0 0
    %229 = vmatmul.mubr.bf16.gmra.mrb[0].mxu0 %v192
    %v230 = vpop.f32.mrb[0].mxu0
    %v231 = vadd.f32 0.0, %v230
    %v232 = vpop.f32.mrb[0].mxu0
    %v233 = vpop.f32.mrb[0].mxu0
    %v234 = vpop.f32.mrb[0].mxu0
    %235 = vdwg.mxu0
    %236 = vmatprep.subr.bf16.mxu0 0
    %237 = vmatpush1.bf16.xpose.msra.mxu0 %v195
    %238 = vmatprep.subr.bf16.mxu0 0
    %239 = vmatpush1.bf16.xpose.msra.mxu0 0
    %240 = vmatprep.subr.bf16.mxu0 0
    %241 = vmatpush1.bf16.xpose.msra.mxu0 0
    %242 = vmatprep.subr.bf16.mxu0 0
    %243 = vmatpush1.bf16.xpose.msra.mxu0 0
    %244 = vmatprep.subr.bf16.mxu0 0
    %245 = vmatpush1.bf16.xpose.msra.mxu0 0
    %246 = vmatprep.subr.bf16.mxu0 0
    %247 = vmatpush1.bf16.xpose.msra.mxu0 0
    %248 = vmatprep.subr.bf16.mxu0 0
    %249 = vmatpush1.bf16.xpose.msra.mxu0 0
    %250 = vmatprep.subr.bf16.mxu0 0
    %251 = vmatpush1.bf16.xpose.msra.mxu0 0
    %252 = vmatprep.subr.bf16.mxu0 0
    %253 = vmatpush1.bf16.xpose.msra.mxu0 0
    %254 = vmatprep.subr.bf16.mxu0 0
    %255 = vmatpush1.bf16.xpose.msra.mxu0 0
    %256 = vmatprep.subr.bf16.mxu0 0
    %257 = vmatpush1.bf16.xpose.msra.mxu0 0
    %258 = vmatprep.subr.bf16.mxu0 0
    %259 = vmatpush1.bf16.xpose.msra.mxu0 0
    %260 = vmatprep.subr.bf16.mxu0 0
    %261 = vmatpush1.bf16.xpose.msra.mxu0 0
    %262 = vmatprep.subr.bf16.mxu0 0
    %263 = vmatpush1.bf16.xpose.msra.mxu0 0
    %264 = vmatprep.subr.bf16.mxu0 0
    %265 = vmatpush1.bf16.xpose.msra.mxu0 0
    %266 = vmatprep.subr.bf16.mxu0 0
    %267 = vmatpush1.bf16.xpose.msra.mxu0 0
    %268 = vmatprep.mubr.bf16.mxu0 0
    %269 = vmatmul.mubr.bf16.gmra.mrb[0].mxu0 %v193
    %v270 = vpop.f32.mrb[0].mxu0
    %v271 = vadd.f32 0.0, %v270
    %v272 = vpop.f32.mrb[0].mxu0
    %v273 = vpop.f32.mrb[0].mxu0
    %v274 = vpop.f32.mrb[0].mxu0
    %275 = vdwg.mxu0
    %vm276 = vcmask 64512
    %v277 = vsel %vm276, %v231, -inf
    %278 = vmax.xlane.f32.xlu0 %v277
    %v279 = vpop.xlane.xlu0 %278
    %v280 = vsel %vm276, %v271, -inf
    %281 = vmax.xlane.f32.xlu0 %v280
    %v282 = vpop.xlane.xlu0 %281
    %v283 = vsub.f32 %v231, %v279
    %v284 = vsub.f32 %v271, %v282
    %v285 = vmul.f32 %v283, 1.442695
    %v286 = vpow.pop %v285
    %v287 = vmul.f32 %v284, 1.442695
    %v288 = vpow.pop %v287
    %v289 = vsel %vm276, %v286, 0.0
    %290 = vadd.xlane.f32.xlu0 %v289
    %v291 = vpop.xlane.xlu0 %290
    %v292 = vsel %vm276, %v288, 0.0
    %293 = vadd.xlane.f32.xlu0 %v292
    %v294 = vpop.xlane.xlu0 %293
    %v295 = vrcp.pop %v291
    %v296 = vrcp.pop %v294
    %v297 = vmul.f32 %v286, %v295
    %v298 = vmul.f32 %v288, %v296
    %v299 = vpack.c.bf16 %v297, %v297
    %v300 = vpack.c.bf16 %v298, %v298
    %v302 = vsel %vm276, %v299, 0
    %vm304 = vcmask 1043456
    %v306 = vsel %vm304, %v194, 0
    %308 = vmatprep.subr.bf16.mxu0 0
    %309 = vmatpush1.bf16.msra.mxu0 %v306
    %310 = vmatprep.subr.bf16.mxu0 0
    %311 = vmatpush1.bf16.msra.mxu0 0
    %312 = vmatprep.subr.bf16.mxu0 0
    %313 = vmatpush1.bf16.msra.mxu0 0
    %314 = vmatprep.subr.bf16.mxu0 0
    %315 = vmatpush1.bf16.msra.mxu0 0
    %316 = vmatprep.subr.bf16.mxu0 0
    %317 = vmatpush1.bf16.msra.mxu0 0
    %318 = vmatprep.subr.bf16.mxu0 0
    %319 = vmatpush1.bf16.msra.mxu0 0
    %320 = vmatprep.subr.bf16.mxu0 0
    %321 = vmatpush1.bf16.msra.mxu0 0
    %322 = vmatprep.subr.bf16.mxu0 0
    %323 = vmatpush1.bf16.msra.mxu0 0
    %324 = vmatprep.subr.bf16.mxu0 0
    %325 = vmatpush1.bf16.msra.mxu0 0
    %326 = vmatprep.subr.bf16.mxu0 0
    %327 = vmatpush1.bf16.msra.mxu0 0
    %328 = vmatprep.subr.bf16.mxu0 0
    %329 = vmatpush1.bf16.msra.mxu0 0
    %330 = vmatprep.subr.bf16.mxu0 0
    %331 = vmatpush1.bf16.msra.mxu0 0
    %332 = vmatprep.subr.bf16.mxu0 0
    %333 = vmatpush1.bf16.msra.mxu0 0
    %334 = vmatprep.subr.bf16.mxu0 0
    %335 = vmatpush1.bf16.msra.mxu0 0
    %336 = vmatprep.subr.bf16.mxu0 0
    %337 = vmatpush1.bf16.msra.mxu0 0
    %338 = vmatprep.subr.bf16.mxu0 0
    %339 = vmatpush1.bf16.msra.mxu0 0
    %340 = vmatprep.mubr.bf16.mxu0 0
    %341 = vmatmul.mubr.bf16.gmra.mrb[0].mxu0 %v302
    %v342 = vpop.f32.mrb[0].mxu0
    %v343 = vadd.f32 %v98, %v342
    %v344 = vpop.f32.mrb[0].mxu0
    %v345 = vpop.f32.mrb[0].mxu0
    %v346 = vpop.f32.mrb[0].mxu0
    %347 = vdwg.mxu0
    %v349 = vsel %vm276, %v300, 0
    %v352 = vsel %vm304, %v195, 0
    %354 = vmatprep.subr.bf16.mxu0 0
    %355 = vmatpush1.bf16.msra.mxu0 %v352
    %356 = vmatprep.subr.bf16.mxu0 0
    %357 = vmatpush1.bf16.msra.mxu0 0
    %358 = vmatprep.subr.bf16.mxu0 0
    %359 = vmatpush1.bf16.msra.mxu0 0
    %360 = vmatprep.subr.bf16.mxu0 0
    %361 = vmatpush1.bf16.msra.mxu0 0
    %362 = vmatprep.subr.bf16.mxu0 0
    %363 = vmatpush1.bf16.msra.mxu0 0
    %364 = vmatprep.subr.bf16.mxu0 0
    %365 = vmatpush1.bf16.msra.mxu0 0
    %366 = vmatprep.subr.bf16.mxu0 0
    %367 = vmatpush1.bf16.msra.mxu0 0
    %368 = vmatprep.subr.bf16.mxu0 0
    %369 = vmatpush1.bf16.msra.mxu0 0
    %370 = vmatprep.subr.bf16.mxu0 0
    %371 = vmatpush1.bf16.msra.mxu0 0
    %372 = vmatprep.subr.bf16.mxu0 0
    %373 = vmatpush1.bf16.msra.mxu0 0
    %374 = vmatprep.subr.bf16.mxu0 0
    %375 = vmatpush1.bf16.msra.mxu0 0
    %376 = vmatprep.subr.bf16.mxu0 0
    %377 = vmatpush1.bf16.msra.mxu0 0
    %378 = vmatprep.subr.bf16.mxu0 0
    %379 = vmatpush1.bf16.msra.mxu0 0
    %380 = vmatprep.subr.bf16.mxu0 0
    %381 = vmatpush1.bf16.msra.mxu0 0
    %382 = vmatprep.subr.bf16.mxu0 0
    %383 = vmatpush1.bf16.msra.mxu0 0
    %384 = vmatprep.subr.bf16.mxu0 0
    %385 = vmatpush1.bf16.msra.mxu0 0
    %386 = vmatprep.mubr.bf16.mxu0 0
    %387 = vmatmul.mubr.bf16.gmra.mrb[0].mxu0 %v349
    %v388 = vpop.f32.mrb[0].mxu0
    %v389 = vadd.f32 %v99, %v388
    %v390 = vpop.f32.mrb[0].mxu0
    %v391 = vpop.f32.mrb[0].mxu0
    %v392 = vpop.f32.mrb[0].mxu0
    %393 = vdwg.mxu0
    %v394 = vld [vmem:[%s6] sm:$0x1]
    %v395 = vld [vmem:[%s7] sm:$0x1]
    %396 = vadd.xlane.f32.xlu0 %v343
    %v397 = vpop.xlane.xlu0 %396
    %398 = vadd.xlane.f32.xlu0 %v389
    %v399 = vpop.xlane.xlu0 %398
    %v400 = vmul.f32 %v343, %v343
    %v401 = vmul.f32 %v389, %v389
    %402 = vadd.xlane.f32.xlu0 %v400
    %v403 = vpop.xlane.xlu0 %402
    %404 = vadd.xlane.f32.xlu0 %v401
    %v405 = vpop.xlane.xlu0 %404
    %v406 = vmul.f32 %v397, 0.03125
    %v407 = vmul.f32 %v399, 0.03125
    %v408 = vmul.f32 %v403, 0.03125
    %v409 = vmul.f32 %v405, 0.03125
    %v410 = vmul.f32 %v406, %v406
    %v411 = vmul.f32 %v407, %v407
    %v412 = vsub.f32 %v408, %v410
    %v413 = vsub.f32 %v409, %v411
    %v414 = vsub.f32 %v343, %v406
    %v415 = vsub.f32 %v389, %v407
    %v416 = vadd.f32 %v412, 1e-05
    %v417 = vadd.f32 %v413, 1e-05
    %v418 = vrsqrt.pop %v416
    %v419 = vrsqrt.pop %v417
    %v420 = vmul.f32 %v414, %v418
    %v421 = vmul.f32 %v415, %v419
    %v423 = vlaneseq
    %v424 = vshrl.u32 %v423, 7
    %v425 = vsub.s32 0, %v424
    %v426 = vrot.slane %v394, %v425
    %v428 = vmul.f32 %v420, %v426
    %v429 = vmul.f32 %v421, %v426
    %v431 = vlaneseq
    %v432 = vshrl.u32 %v431, 7
    %v433 = vsub.s32 0, %v432
    %v434 = vrot.slane %v395, %v433
    %v436 = vadd.f32 %v428, %v434
    %v437 = vadd.f32 %v429, %v434
    %v438 = vpack.c.bf16 %v437, %v436
    %v439 = vld [vmem:[#allocation7] sm:$0xf]
    %v440 = vld [vmem:[#allocation7 + $0x4] sm:$0xf]
    %v441 = vld [vmem:[#allocation7 + $0x8] sm:$0xf]
    %v442 = vld [vmem:[#allocation7 + $0xc] sm:$0xf]
    %v443 = vld [vmem:[#allocation7 + $0x10] sm:$0xf]
    %v444 = vld [vmem:[#allocation7 + $0x14] sm:$0xf]
    %v445 = vld [vmem:[#allocation7 + $0x18] sm:$0xf]
    %v446 = vld [vmem:[#allocation7 + $0x1c] sm:$0xf]
    %v447 = vld [vmem:[#allocation7 + $0x20] sm:$0xf]
    %v448 = vld [vmem:[#allocation7 + $0x24] sm:$0xf]
    %v449 = vld [vmem:[#allocation7 + $0x28] sm:$0xf]
    %v450 = vld [vmem:[#allocation7 + $0x2c] sm:$0xf]
    %v451 = vld [vmem:[#allocation7 + $0x30] sm:$0xf]
    %v452 = vld [vmem:[#allocation7 + $0x34] sm:$0xf]
    %v453 = vld [vmem:[#allocation7 + $0x38] sm:$0xf]
    %v454 = vld [vmem:[#allocation7 + $0x3c] sm:$0xf]
    %v455 = vld [vmem:[%s9] sm:$0x1]
    %v457 = vlaneseq
    %v458 = vshrl.u32 %v457, 7
    %v459 = vsub.s32 0, %v458
    %v460 = vrot.slane %v455, %v459
    %v478 = vunpack.c.l.b16 %v439
    %v479 = vunpack.c.l.b16 %v440
    %v480 = vunpack.c.l.b16 %v441
    %v481 = vunpack.c.l.b16 %v442
    %v482 = vunpack.c.l.b16 %v443
    %v483 = vunpack.c.l.b16 %v444
    %v484 = vunpack.c.l.b16 %v445
    %v485 = vunpack.c.l.b16 %v446
    %v486 = vunpack.c.l.b16 %v447
    %v487 = vunpack.c.l.b16 %v448
    %v488 = vunpack.c.l.b16 %v449
    %v489 = vunpack.c.l.b16 %v450
    %v490 = vunpack.c.l.b16 %v451
    %v491 = vunpack.c.l.b16 %v452
    %v492 = vunpack.c.l.b16 %v453
    %v493 = vunpack.c.l.b16 %v454
    %v494 = vpack.c.b16 %v479, %v478
    %v495 = vpack.c.b16 %v481, %v480
    %v496 = vpack.c.b16 %v483, %v482
    %v497 = vpack.c.b16 %v485, %v484
    %v498 = vpack.c.b16 %v487, %v486
    %v499 = vpack.c.b16 %v489, %v488
    %v500 = vpack.c.b16 %v491, %v490
    %v501 = vpack.c.b16 %v493, %v492
    %510 = vmatprep.subr.bf16.mxu0 0
    %511 = vmatpush1.bf16.msra.mxu0 %v494
    %512 = vmatprep.subr.bf16.mxu0 0
    %513 = vmatpush1.bf16.msra.mxu0 %v495
    %514 = vmatprep.subr.bf16.mxu0 0
    %515 = vmatpush1.bf16.msra.mxu0 %v496
    %516 = vmatprep.subr.bf16.mxu0 0
    %517 = vmatpush1.bf16.msra.mxu0 %v497
    %518 = vmatprep.subr.bf16.mxu0 0
    %519 = vmatpush1.bf16.msra.mxu0 %v498
    %520 = vmatprep.subr.bf16.mxu0 0
    %521 = vmatpush1.bf16.msra.mxu0 %v499
    %522 = vmatprep.subr.bf16.mxu0 0
    %523 = vmatpush1.bf16.msra.mxu0 %v500
    %524 = vmatprep.subr.bf16.mxu0 0
    %525 = vmatpush1.bf16.msra.mxu0 %v501
    %526 = vmatprep.subr.bf16.mxu0 0
    %527 = vmatpush1.bf16.msra.mxu0 0
    %528 = vmatprep.subr.bf16.mxu0 0
    %529 = vmatpush1.bf16.msra.mxu0 0
    %530 = vmatprep.subr.bf16.mxu0 0
    %531 = vmatpush1.bf16.msra.mxu0 0
    %532 = vmatprep.subr.bf16.mxu0 0
    %533 = vmatpush1.bf16.msra.mxu0 0
    %534 = vmatprep.subr.bf16.mxu0 0
    %535 = vmatpush1.bf16.msra.mxu0 0
    %536 = vmatprep.subr.bf16.mxu0 0
    %537 = vmatpush1.bf16.msra.mxu0 0
    %538 = vmatprep.subr.bf16.mxu0 0
    %539 = vmatpush1.bf16.msra.mxu0 0
    %540 = vmatprep.subr.bf16.mxu0 0
    %541 = vmatpush1.bf16.msra.mxu0 0
    %542 = vmatprep.mubr.bf16.mxu0 0
    %543 = vmatmul.mubr.bf16.gmra.mrb[0].mxu0 %v438
    %v544 = vpop.f32.mrb[0].mxu0
    %v545 = vadd.f32 %v460, %v544
    %v546 = vpop.f32.mrb[0].mxu0
    %v547 = vpop.f32.mrb[0].mxu0
    %v548 = vadd.f32 %v460, %v547
    %v549 = vpop.f32.mrb[0].mxu0
    %550 = vdwg.mxu0
    %v551 = vmax.f32 %v545, 0.0
    %v552 = vmax.f32 %v548, 0.0
    %v553 = vpack.c.bf16 %v552, %v551
    %v554 = vld [vmem:[#allocation8] sm:$0xf]
    %v555 = vld [vmem:[#allocation8 + $0x4] sm:$0xf]
    %v556 = vld [vmem:[#allocation8 + $0x8] sm:$0xf]
    %v557 = vld [vmem:[#allocation8 + $0xc] sm:$0xf]
    %v558 = vld [vmem:[#allocation8 + $0x10] sm:$0xf]
    %v559 = vld [vmem:[#allocation8 + $0x14] sm:$0xf]
    %v560 = vld [vmem:[#allocation8 + $0x18] sm:$0xf]
    %v561 = vld [vmem:[#allocation8 + $0x1c] sm:$0xf]
    %v562 = vld [vmem:[#allocation8 + $0x20] sm:$0xf]
    %v563 = vld [vmem:[#allocation8 + $0x24] sm:$0xf]
    %v564 = vld [vmem:[#allocation8 + $0x28] sm:$0xf]
    %v565 = vld [vmem:[#allocation8 + $0x2c] sm:$0xf]
    %v566 = vld [vmem:[#allocation8 + $0x30] sm:$0xf]
    %v567 = vld [vmem:[#allocation8 + $0x34] sm:$0xf]
    %v568 = vld [vmem:[#allocation8 + $0x38] sm:$0xf]
    %v569 = vld [vmem:[#allocation8 + $0x3c] sm:$0xf]
    %v570 = vld [vmem:[%s11] sm:$0x1]
    %v572 = vlaneseq
    %v573 = vshrl.u32 %v572, 7
    %v574 = vsub.s32 0, %v573
    %v575 = vrot.slane %v570, %v574
    %v593 = vunpack.c.l.b16 %v554
    %v594 = vunpack.c.l.b16 %v555
    %v595 = vunpack.c.l.b16 %v556
    %v596 = vunpack.c.l.b16 %v557
    %v597 = vunpack.c.l.b16 %v558
    %v598 = vunpack.c.l.b16 %v559
    %v599 = vunpack.c.l.b16 %v560
    %v600 = vunpack.c.l.b16 %v561
    %v601 = vunpack.c.l.b16 %v562
    %v602 = vunpack.c.l.b16 %v563
    %v603 = vunpack.c.l.b16 %v564
    %v604 = vunpack.c.l.b16 %v565
    %v605 = vunpack.c.l.b16 %v566
    %v606 = vunpack.c.l.b16 %v567
    %v607 = vunpack.c.l.b16 %v568
    %v608 = vunpack.c.l.b16 %v569
    %v609 = vpack.c.b16 %v594, %v593
    %v610 = vpack.c.b16 %v596, %v595
    %v611 = vpack.c.b16 %v598, %v597
    %v612 = vpack.c.b16 %v600, %v599
    %v613 = vpack.c.b16 %v602, %v601
    %v614 = vpack.c.b16 %v604, %v603
    %v615 = vpack.c.b16 %v606, %v605
    %v616 = vpack.c.b16 %v608, %v607
    %625 = vmatprep.subr.bf16.mxu0 0
    %626 = vmatpush1.bf16.msra.mxu0 %v609
    %627 = vmatprep.subr.bf16.mxu0 0
    %628 = vmatpush1.bf16.msra.mxu0 %v610
    %629 = vmatprep.subr.bf16.mxu0 0
    %630 = vmatpush1.bf16.msra.mxu0 %v611
    %631 = vmatprep.subr.bf16.mxu0 0
    %632 = vmatpush1.bf16.msra.mxu0 %v612
    %633 = vmatprep.subr.bf16.mxu0 0
    %634 = vmatpush1.bf16.msra.mxu0 %v613
    %635 = vmatprep.subr.bf16.mxu0 0
    %636 = vmatpush1.bf16.msra.mxu0 %v614
    %637 = vmatprep.subr.bf16.mxu0 0
    %638 = vmatpush1.bf16.msra.mxu0 %v615
    %639 = vmatprep.subr.bf16.mxu0 0
    %640 = vmatpush1.bf16.msra.mxu0 %v616
    %641 = vmatprep.subr.bf16.mxu0 0
    %642 = vmatpush1.bf16.msra.mxu0 0
    %643 = vmatprep.subr.bf16.mxu0 0
    %644 = vmatpush1.bf16.msra.mxu0 0
    %645 = vmatprep.subr.bf16.mxu0 0
    %646 = vmatpush1.bf16.msra.mxu0 0
    %647 = vmatprep.subr.bf16.mxu0 0
    %648 = vmatpush1.bf16.msra.mxu0 0
    %649 = vmatprep.subr.bf16.mxu0 0
    %650 = vmatpush1.bf16.msra.mxu0 0
    %651 = vmatprep.subr.bf16.mxu0 0
    %652 = vmatpush1.bf16.msra.mxu0 0
    %653 = vmatprep.subr.bf16.mxu0 0
    %654 = vmatpush1.bf16.msra.mxu0 0
    %655 = vmatprep.subr.bf16.mxu0 0
    %656 = vmatpush1.bf16.msra.mxu0 0
    %657 = vmatprep.mubr.bf16.mxu0 0
    %658 = vmatmul.mubr.bf16.gmra.mrb[0].mxu0 %v553
    %v659 = vpop.f32.mrb[0].mxu0
    %v660 = vadd.f32 %v575, %v659
    %v661 = vpop.f32.mrb[0].mxu0
    %v662 = vpop.f32.mrb[0].mxu0
    %v663 = vadd.f32 %v575, %v662
    %v664 = vpop.f32.mrb[0].mxu0
    %665 = vdwg.mxu0
    %v666 = vadd.f32 %v343, %v660
    %v667 = vadd.f32 %v389, %v663
    %668 = vst [vmem:[#allocation10] sm:$0xff] %v666
    %669 = vst [vmem:[#allocation10 + $0x8] sm:$0xff] %v667
    // Predicated region
    $region66: #{tpu_custom_call.1} parent=1 // pred_check
      _
    $region67: #{tpu_custom_call.1} parent=1 // pred_check_branch
      %671 = sbr.rel (0) target = $region69
    $region68: #{tpu_custom_call.1} parent=1 // pred_region
      %s673 = ssub.s32 256, 256
      %674 = vsyncadd [#allocation4], %s673
      %s675 = sshll.u32 [#allocation10], 4
      %s676 = int_to_ptr.vmem [resolvable:$true] %s675
      %681 = dma.vmem_to_hbm [thread:$0]  %s676, 256, %s12, [#allocation4], 128, 128, 8
    $region69: #{tpu_custom_call.1} parent=1 // pred_fallthru
      _
    // Predicated region
    $region70: #{tpu_custom_call.1} parent=1 // pred_check
      _
    $region71: #{tpu_custom_call.1} parent=1 // pred_check_branch
      %683 = sbr.rel (0) target = $region73
    $region72: #{tpu_custom_call.1} parent=1 // pred_region
      %684 = dma.done [#allocation4], 256
    $region73: #{tpu_custom_call.1} parent=1 // pred_fallthru
      _
    %685 = vsyncpa [#allocation3], 1
    %686 = vsyncpa [#allocation6], 1
    %687 = vsyncpa [#allocation9], 1
    %688 = vsyncpa [#allocation4], 1

</llo_original>
